<compile_context>
chip_gen: v6e
topology: v6e:2x2x1
jax: 0.10.0
libtpu: 0.0.40
codegen_flags: <defaults>
</compile_context>

<pallas_src>
import functools

import numpy as np
import jax
import jax.numpy as jnp
from jax import lax
from jax.experimental import pallas as pl
from jax.experimental.pallas import tpu as pltpu

EPS = 1e-6
_NEG_INF = -1e30


def _ns_loss_kernel(x_ref, ypos_ref, neg_ref, loss_ref, *,
                    nsamples, s1, inv_seq_len):
    """One tile of tile_s sequence steps.

    x_ref    : (T, Ha)    augmented anchors    [x_i      | -1        ]
    ypos_ref : (T, Ha)    augmented positives  [ypos_i   | pos_bias_i]
    neg_ref  : (T*N, Ha)  augmented negatives  [yneg_ij  | neg_bias_ij]
    loss_ref : (8, 128)   per-core partial-loss accumulator (all elems equal)
    """
    c = pl.program_id(0)                     # core-split index ("parallel")
    t = pl.program_id(1)                     # sequence-tile index ("arbitrary")
    tiles_per_core = pl.num_programs(1)
    g_tile = c * tiles_per_core + t          # global tile index

    @pl.when(t == 0)
    def _():
        loss_ref[...] = jnp.zeros_like(loss_ref)

    T = x_ref.shape[0]
    N = nsamples

    x = x_ref[...]                           # (T, Ha)   input dtype
    yp = ypos_ref[...]                       # (T, Ha)
    yn = neg_ref[...]                        # (T*N, Ha)

    # pos_i = -<x_i, ypos_i> + bias[data[i-1, 0]]   (bias folded in last col)
    pos = -jnp.sum(x.astype(jnp.float32) * yp.astype(jnp.float32),
                   axis=-1, keepdims=True)                           # (T, 1)

    # MXU: scores[s, r] = <x_aug[s], yneg_aug[r]> ;  dist = -scores
    scores = lax.dot_general(x, yn, (((1,), (1,)), ((), ())),
                             preferred_element_type=jnp.float32)     # (T, T*N)
    dist = -scores

    # Keep only the block-diagonal band (row s owns columns [s*N, (s+1)*N))
    # and mask padded / out-of-range sequence steps.
    row = lax.broadcasted_iota(jnp.int32, (T, T * N), 0)
    col = lax.broadcasted_iota(jnp.int32, (T, T * N), 1)
    step = g_tile * T + row
    in_band = (col >= row * N) & (col < row * N + N) & (step < s1)
    dist = jnp.where(in_band, dist, _NEG_INF)

    # Numerically stable log(eps + sum_j exp(dist_ij))  (exact algebra;
    # the -60 clamp only kicks in on fully-masked / deep-underflow rows).
    m = jnp.maximum(jnp.max(dist, axis=-1, keepdims=True), -60.0)    # (T, 1)
    neg = m + jnp.log(EPS * jnp.exp(-m) +
                      jnp.sum(jnp.exp(dist - m), axis=-1, keepdims=True))

    step_col = g_tile * T + lax.broadcasted_iota(jnp.int32, (T, 1), 0)
    contrib = jnp.where(step_col < s1, neg - pos, 0.0)                # (T, 1)

    loss_ref[...] += jnp.sum(contrib) * inv_seq_len


def negative_sample_loss(output, data, bias, *, tile_s=None, num_splits=2):
    """Pallas implementation of NegativeSampleCriterion.forward with
    dist_fn(x, y) = F.linear(x, y) = x @ y.T (the module's own _distance)."""
    seq_len, total, hsz = output.shape
    n = (total - 1) // (seq_len - 1)
    s1 = seq_len - 1
    dt = output.dtype
    itemsize = jnp.dtype(dt).itemsize
    sub = {4: 8, 2: 16, 1: 32}.get(itemsize, 8)     # dtype-aware sublane tile
    ha = hsz + 1                                    # hidden + folded-in bias col
    ha_lanes = -(-ha // 128) * 128                  # VMEM lane footprint

    try:                                            # generation-aware budget
        vmem_cap = int(pltpu.get_tpu_info().vmem_capacity_bytes)
    except Exception:
        vmem_cap = 64 * 1024 * 1024                 # conservative (v7x per-core)

    if tile_s is None:
        budget = int(0.40 * vmem_cap)               # double-buffered input streams
        per_step = (n + 2) * ha_lanes * itemsize
        cap_mem = budget // (2 * per_step)
        cap_quad = int((4 * 1024 * 1024 / (4.0 * n)) ** 0.5)  # (T,T*N) f32 tile
        tile_s = max(sub, min(cap_mem, cap_quad, 256))
    tile_s = max(sub, (tile_s // sub) * sub)
    need = -(-s1 // num_splits)                     # steps per core
    tile_s = min(tile_s, -(-need // sub) * sub)

    tiles_per_core = -(-s1 // (num_splits * tile_s))
    s1p = num_splits * tiles_per_core * tile_s      # padded step count

    # --- Wrapper-side gather (tiny indexing glue; negatives become one
    #     contiguous lane-dense slab that BlockSpec auto-pipelines). ---
    k = jnp.arange(s1)
    cols = 1 + k[:, None] * n + jnp.arange(n)[None, :]          # (s1, N)
    x = output[:s1, 0, :]                                        # (s1, H)
    ypos = output[1:, 0, :]                                      # (s1, H)
    negs = output[(1 + k)[:, None], cols, :]                     # (s1, N, H)
    pbias = bias[data[:s1, 0]].astype(dt)[:, None]               # (s1, 1)
    nbias = bias[data[k[:, None], cols]].astype(dt)[..., None]   # (s1, N, 1)

    minus1 = jnp.full((s1, 1), -1.0, dtype=dt)
    x_aug = jnp.concatenate([x, minus1], axis=1)                 # (s1, Ha)
    ypos_aug = jnp.concatenate([ypos, pbias], axis=1)            # (s1, Ha)
    negs_aug = jnp.concatenate([negs, nbias], axis=2)            # (s1, N, Ha)
    negs_flat = negs_aug.reshape(s1 * n, ha)                     # (s1*N, Ha)

    pad = s1p - s1
    if pad:
        x_aug = jnp.pad(x_aug, ((0, pad), (0, 0)))
        ypos_aug = jnp.pad(ypos_aug, ((0, pad), (0, 0)))
        negs_flat = jnp.pad(negs_flat, ((0, pad * n), (0, 0)))

    kernel = functools.partial(_ns_loss_kernel, nsamples=n, s1=s1,
                               inv_seq_len=1.0 / seq_len)

    blk_in = (n + 2) * tile_s * ha_lanes * itemsize
    interm = 4 * tile_s * tile_s * n * 4
    vmem_limit = int(min(int(0.85 * vmem_cap),
                         max(16 * 1024 * 1024,
                             4 * blk_in + interm + (1 << 20))))

    cost = pl.CostEstimate(
        flops=2 * s1p * tile_s * n * ha + 2 * s1p * ha,
        transcendentals=s1p * tile_s * n + 2 * s1p,
        bytes_accessed=s1p * (n + 2) * ha * itemsize + num_splits * 8 * 128 * 4,
    )

    idx = lambda c, t: (c * tiles_per_core + t, 0)
    out = pl.pallas_call(
        kernel,
        out_shape=jax.ShapeDtypeStruct((num_splits * 8, 128), jnp.float32),
        grid_spec=pltpu.PrefetchScalarGridSpec(
            num_scalar_prefetch=0,
            grid=(num_splits, tiles_per_core),
            in_specs=[
                pl.BlockSpec((tile_s, ha), idx),        # augmented anchors
                pl.BlockSpec((tile_s, ha), idx),        # augmented positives
                pl.BlockSpec((tile_s * n, ha), idx),    # augmented negatives (flat)
            ],
            out_specs=pl.BlockSpec((8, 128), lambda c, t: (c, 0)),
        ),
        compiler_params=pltpu.CompilerParams(
            dimension_semantics=("parallel", "arbitrary"),
            vmem_limit_bytes=vmem_limit),
        cost_estimate=cost,
    )(x_aug, ypos_aug, negs_flat)

    # Every element of core c's (8,128) block holds that core's partial sum.
    return jnp.sum(out[::8, 0]).reshape(1)      # PyTorch returns a length-1 tensor


def _reference(output, data, bias):
    """Pure-numpy transcription of the PyTorch loop (dist_fn = F.linear)."""
    output = np.asarray(output, dtype=np.float64)
    data = np.asarray(data)
    bias = np.asarray(bias, dtype=np.float64)
    seq_len, total, _ = output.shape
    nsamples = (total - 1) // (seq_len - 1)
    loss = np.zeros((1,), dtype=np.float64)
    for i in range(1, seq_len):
        xv = output[i - 1, 0]
        pos = -(output[i, 0:1] @ xv) + bias[data[i - 1, 0]]
        left, right = (i - 1) * nsamples + 1, i * nsamples + 1
        temp_bias = bias[data[i - 1, left:right]]
        dist = -(output[i, left:right] @ xv) + temp_bias
        neg = np.log(EPS + np.sum(np.exp(dist)))
        loss -= (pos - neg) / seq_len
    return loss


if __name__ == "__main__":
    # Small shapes consistent with the forward: seq_len=8, nsamples=5, hsz=32.
    seq_len, nsamples, hsz, vocab = 8, 5, 32, 64
    total = (seq_len - 1) * nsamples + 1   # = 36

    key = jax.random.PRNGKey(0)
    k1, k2, k3 = jax.random.split(key, 3)
    output = jax.random.normal(k1, (seq_len, total, hsz), dtype=jnp.float32) * 0.1
    data = jax.random.randint(k2, (seq_len, total), 0, vocab, dtype=jnp.int32)
    bias = jax.random.normal(k3, (vocab,), dtype=jnp.float32) * 0.1

    loss = negative_sample_loss(output, data, bias)
    loss = jax.block_until_ready(loss)

    ref = _reference(output, data, bias)
    # Tolerance covers the MXU default-precision f32 matmul; an indexing /
    # masking bug would be off by O(0.1-1), far outside this band.
    assert np.allclose(np.asarray(loss), ref, rtol=5e-3, atol=1e-3), (loss, ref)
    print("KERNEL_OK")
</pallas_src>

<mosaic_0001>
module attributes {stable_mosaic.version = 11 : i64} {
  func.func @_ns_loss_kernel(%arg0: i32, %arg1: i32, %arg2: memref<8x33xf32, #tpu.memory_space<vmem>>, %arg3: memref<8x33xf32, #tpu.memory_space<vmem>>, %arg4: memref<40x33xf32, #tpu.memory_space<vmem>>, %arg5: memref<8x128xf32, #tpu.memory_space<vmem>>) attributes {dimension_semantics = [#tpu.dimension_semantics<parallel>, #tpu.dimension_semantics<arbitrary>], iteration_bounds = array<i64: 2, 1>, scalar_prefetch = 0 : i64, scratch_operands = 0 : i64, tpu.core_type = #tpu.core_type<tc>, window_params = [{transform_indices = @transform_0, window_bounds = array<i64: 8, 33>}, {transform_indices = @transform_1, window_bounds = array<i64: 8, 33>}, {transform_indices = @transform_2, window_bounds = array<i64: 40, 33>}, {transform_indices = @transform_3, window_bounds = array<i64: 8, 128>}]} {
    %c1_i32 = arith.constant 1 : i32
    %0 = arith.muli %arg0, %c1_i32 : i32
    %1 = arith.addi %0, %arg1 : i32
    %c0_i32 = arith.constant 0 : i32
    %2 = arith.cmpi eq, %arg1, %c0_i32 : i32
    %3 = arith.extui %2 : i1 to i32
    %c0_i32_0 = arith.constant 0 : i32
    %4 = arith.cmpi ne, %3, %c0_i32_0 : i32
    scf.if %4 {
      %cst_26 = arith.constant 0.000000e+00 : f32
      %70 = vector.broadcast %cst_26 : f32 to vector<8x128xf32>
      %c0_27 = arith.constant 0 : index
      %c0_28 = arith.constant 0 : index
      %71 = vector.load %arg5[%c0_27, %c0_28] : memref<8x128xf32, #tpu.memory_space<vmem>>, vector<8x128xf32>
      tpu.vector_store %arg5[%c0_27, %c0_28], %70 {strides = array<i32>} : memref<8x128xf32, #tpu.memory_space<vmem>>, vector<8x128xf32>,
    } else {
    }
    %c0 = arith.constant 0 : index
    %c0_1 = arith.constant 0 : index
    %5 = vector.load %arg2[%c0, %c0_1] : memref<8x33xf32, #tpu.memory_space<vmem>>, vector<8x33xf32>
    %c0_2 = arith.constant 0 : index
    %c0_3 = arith.constant 0 : index
    %6 = vector.load %arg3[%c0_2, %c0_3] : memref<8x33xf32, #tpu.memory_space<vmem>>, vector<8x33xf32>
    %c0_4 = arith.constant 0 : index
    %c0_5 = arith.constant 0 : index
    %7 = vector.load %arg4[%c0_4, %c0_5] : memref<40x33xf32, #tpu.memory_space<vmem>>, vector<40x33xf32>
    %8 = arith.mulf %5, %6 : vector<8x33xf32>
    %cst = arith.constant dense<0.000000e+00> : vector<8xf32>
    %9 = vector.multi_reduction <add>, %8, %cst [1] : vector<8x33xf32> to vector<8xf32>
    %10 = vector.shape_cast %9 : vector<8xf32> to vector<8x1xf32>
    %cst_6 = arith.constant 0.000000e+00 : f32
    %11 = vector.broadcast %cst_6 : f32 to vector<8x1xf32>
    %12 = arith.subf %11, %10 : vector<8x1xf32>
    %cst_7 = arith.constant dense<0.000000e+00> : vector<8x40xf32>
    %13 = tpu.matmul %5, %7, %cst_7 {dimension_numbers = #tpu.dot_dimension_numbers<[1], [1], [0], [0], [0, 0, 1, 0], [], []>} : vector<8x33xf32>, vector<40x33xf32>, vector<8x40xf32> -> vector<8x40xf32>
    %cst_8 = arith.constant 0.000000e+00 : f32
    %14 = vector.broadcast %cst_8 : f32 to vector<8x40xf32>
    %15 = arith.subf %14, %13 : vector<8x40xf32>
    %16 = tpu.iota {dimensions = array<i32: 0>} : vector<8x40xi32>
    %17 = tpu.iota {dimensions = array<i32: 1>} : vector<8x40xi32>
    %c8_i32 = arith.constant 8 : i32
    %18 = arith.muli %1, %c8_i32 : i32
    %19 = vector.broadcast %18 : i32 to vector<8x40xi32>
    %20 = arith.addi %19, %16 : vector<8x40xi32>
    %c5_i32 = arith.constant 5 : i32
    %21 = vector.broadcast %c5_i32 : i32 to vector<8x40xi32>
    %22 = arith.muli %16, %21 : vector<8x40xi32>
    %23 = arith.cmpi sge, %17, %22 : vector<8x40xi32>
    %c5_i32_9 = arith.constant 5 : i32
    %24 = vector.broadcast %c5_i32_9 : i32 to vector<8x40xi32>
    %25 = arith.muli %16, %24 : vector<8x40xi32>
    %c5_i32_10 = arith.constant 5 : i32
    %26 = vector.broadcast %c5_i32_10 : i32 to vector<8x40xi32>
    %27 = arith.addi %25, %26 : vector<8x40xi32>
    %28 = arith.cmpi slt, %17, %27 : vector<8x40xi32>
    %29 = arith.andi %23, %28 : vector<8x40xi1>
    %c7_i32 = arith.constant 7 : i32
    %30 = vector.broadcast %c7_i32 : i32 to vector<8x40xi32>
    %31 = arith.cmpi slt, %20, %30 : vector<8x40xi32>
    %32 = arith.andi %29, %31 : vector<8x40xi1>
    %cst_11 = arith.constant -1.000000e+30 : f32
    %33 = vector.broadcast %cst_11 : f32 to vector<8x40xf32>
    %34 = arith.select %32, %15, %33 : vector<8x40xi1>, vector<8x40xf32>
    %cst_12 = arith.constant dense<0xFF800000> : vector<8xf32>
    %35 = vector.multi_reduction <maximumf>, %34, %cst_12 [1] : vector<8x40xf32> to vector<8xf32>
    %36 = vector.shape_cast %35 : vector<8xf32> to vector<8x1xf32>
    %cst_13 = arith.constant -6.000000e+01 : f32
    %37 = vector.broadcast %cst_13 : f32 to vector<8x1xf32>
    %38 = arith.maximumf %36, %37 : vector<8x1xf32>
    %cst_14 = arith.constant 0.000000e+00 : f32
    %39 = vector.broadcast %cst_14 : f32 to vector<8x1xf32>
    %40 = arith.subf %39, %38 : vector<8x1xf32>
    %41 = math.exp %40 : vector<8x1xf32>
    %cst_15 = arith.constant 9.99999997E-7 : f32
    %42 = vector.broadcast %cst_15 : f32 to vector<8x1xf32>
    %43 = arith.mulf %42, %41 : vector<8x1xf32>
    %44 = vector.broadcast %38 : vector<8x1xf32> to vector<8x40xf32>
    %45 = arith.subf %34, %44 : vector<8x40xf32>
    %46 = math.exp %45 : vector<8x40xf32>
    %cst_16 = arith.constant dense<0.000000e+00> : vector<8xf32>
    %47 = vector.multi_reduction <add>, %46, %cst_16 [1] : vector<8x40xf32> to vector<8xf32>
    %48 = vector.shape_cast %47 : vector<8xf32> to vector<8x1xf32>
    %49 = arith.addf %43, %48 : vector<8x1xf32>
    %50 = math.log %49 : vector<8x1xf32>
    %51 = arith.addf %38, %50 : vector<8x1xf32>
    %c8_i32_17 = arith.constant 8 : i32
    %52 = arith.muli %1, %c8_i32_17 : i32
    %53 = tpu.iota {dimensions = array<i32: 0>} : vector<8x1xi32>
    %54 = vector.broadcast %52 : i32 to vector<8x1xi32>
    %55 = arith.addi %54, %53 : vector<8x1xi32>
    %c7_i32_18 = arith.constant 7 : i32
    %56 = vector.broadcast %c7_i32_18 : i32 to vector<8x1xi32>
    %57 = arith.cmpi slt, %55, %56 : vector<8x1xi32>
    %58 = arith.subf %51, %12 : vector<8x1xf32>
    %cst_19 = arith.constant 0.000000e+00 : f32
    %59 = vector.broadcast %cst_19 : f32 to vector<8x1xf32>
    %60 = arith.select %57, %58, %59 : vector<8x1xi1>, vector<8x1xf32>
    %c0_20 = arith.constant 0 : index
    %c0_21 = arith.constant 0 : index
    %61 = vector.load %arg5[%c0_20, %c0_21] : memref<8x128xf32, #tpu.memory_space<vmem>>, vector<8x128xf32>
    %62 = vector.shape_cast %60 : vector<8x1xf32> to vector<1x8x1xf32>
    %cst_22 = arith.constant dense<0.000000e+00> : vector<1xf32>
    %63 = vector.multi_reduction <add>, %62, %cst_22 [1, 2] : vector<1x8x1xf32> to vector<1xf32>
    %64 = vector.shape_cast %63 : vector<1xf32> to vector<1x1x1xf32>
    %65 = vector.extract %64[0, 0, 0] : f32 from vector<1x1x1xf32>
    %cst_23 = arith.constant 1.250000e-01 : f32
    %66 = arith.mulf %65, %cst_23 : f32
    %67 = vector.broadcast %66 : f32 to vector<8x128xf32>
    %68 = arith.addf %61, %67 : vector<8x128xf32>
    %c0_24 = arith.constant 0 : index
    %c0_25 = arith.constant 0 : index
    %69 = vector.load %arg5[%c0_24, %c0_25] : memref<8x128xf32, #tpu.memory_space<vmem>>, vector<8x128xf32>
    tpu.vector_store %arg5[%c0_24, %c0_25], %68 {strides = array<i32>} : memref<8x128xf32, #tpu.memory_space<vmem>>, vector<8x128xf32>,
    return
  }
  func.func @transform_0(%arg0: i32, %arg1: i32) -> (i32, i32) {
    %c1_i32 = arith.constant 1 : i32
    %0 = arith.muli %arg0, %c1_i32 : i32
    %1 = arith.addi %0, %arg1 : i32
    %c0_i32 = arith.constant 0 : i32
    %c0_i32_0 = arith.constant 0 : i32
    return %1, %c0_i32 : i32, i32
  }
  func.func @transform_1(%arg0: i32, %arg1: i32) -> (i32, i32) {
    %c1_i32 = arith.constant 1 : i32
    %0 = arith.muli %arg0, %c1_i32 : i32
    %1 = arith.addi %0, %arg1 : i32
    %c0_i32 = arith.constant 0 : i32
    %c0_i32_0 = arith.constant 0 : i32
    return %1, %c0_i32 : i32, i32
  }
  func.func @transform_2(%arg0: i32, %arg1: i32) -> (i32, i32) {
    %c1_i32 = arith.constant 1 : i32
    %0 = arith.muli %arg0, %c1_i32 : i32
    %1 = arith.addi %0, %arg1 : i32
    %c0_i32 = arith.constant 0 : i32
    %c0_i32_0 = arith.constant 0 : i32
    return %1, %c0_i32 : i32, i32
  }
  func.func @transform_3(%arg0: i32, %arg1: i32) -> (i32, i32) {
    %c0_i32 = arith.constant 0 : i32
    %c0_i32_0 = arith.constant 0 : i32
    return %arg0, %c0_i32 : i32, i32
  }
}

</mosaic_0001>

<llo_original>
// kernel: tpu_custom_call.1
$region0: #{tpu_custom_call.1}
  #allocation0 [shape = 'u32[]', space=smem, size = 0x4, offset = 0x4, fixed_abs, tag = 'smem constant byte address 0x4 - core index']
  #allocation1 [shape = 'u32[144,128]{1,0:T(1,128)}', space=vmem, size = 0x12000, scoped, tag = 'internal scratch']
  %s0 = inlined_call_operand.vmem [shape: f32[16,33], index: 0, kind: input, shape index: {}]
  %s1 = inlined_call_operand.vmem [shape: f32[16,33], index: 1, kind: input, shape index: {}]
  %s2 = inlined_call_operand.vmem [shape: f32[80,33], index: 2, kind: input, shape index: {}]
  %s3 = inlined_call_operand.hbm [shape: f32[16,128], index: 3, kind: output, shape index: {}]
  %s4 = sld [smem:[#allocation0]]
  $region49: #{tpu_custom_call.1} parent=0
    _
  %s6 = ssub.s32 1, %s4
  %s7 = scalar_select 0, %s6, %s4
  $region1: #{tpu_custom_call.1} parent=0
    #allocation2 [shape = 'u8[8192]{0}', space=vmem, size = 0x2000, scoped, tag = 'output window, operand 0']
    #allocation3 [shape = 's32[2]{0}', space=sflag, size = 0x8, scoped, tag = 'scoped memory for tpu_custom_call.1']
    %8 = vsyncpa [#allocation3], 0
    %s9 = scalar_lea.sflag [#allocation3], 1
    %10 = vsyncpa %s9, 0
    loop: start=0, step=1, limit=4
    $region2: #{tpu_custom_call.1} parent=1 // loop_pre_header
      _
    $region3: #{tpu_custom_call.1} parent=1 // loop_header
      %s12 = sphi 0, %s16
      %p13 = scmp.ge.s32.totalorder %s12, 4
      %s19 = sphi 0, %s31
      %s20 = sphi 0, %s27
      %s21 = sphi 0, %s19
      %s22 = sphi 0, %s20
      %s23 = sphi 0, %s21
      %s24 = sphi 0, %s22
      %s36 = sphi 0, %s38
      %s39 = sphi 0, %s36
      %s40 = sphi 0, %s39
      %s56 = sphi 0, %s40
      %s64 = sphi 0, %s66
      %s67 = sphi 0, %s64
      %s68 = sphi 0, %s67
      %s84 = sphi 0, %s68
      %s92 = sphi 0, %s94
      %s95 = sphi 0, %s92
      %s96 = sphi 0, %s95
      %s112 = sphi 0, %s96
      %s118 = sphi 0, %s120
      %s121 = sphi 0, %s118
      %s122 = sphi 0, %s121
      %s138 = sphi 0, %s122
    $region4: #{tpu_custom_call.1} parent=1 // loop_header_branch
      %15 = sbr.rel (%p13) target = $region8
    $region5: #{tpu_custom_call.1} parent=1 // loop_body
      %s17 = ssub.s32 %s12, 1
      %s18 = ssub.s32 %s12, 2
      %s25 = sadd.s32 1, %s20
      %p26 = scmp.ge.s32.totalorder %s25, 1
      %s27 = scalar_select %p26, 0, %s25
      %s28 = sadd.s32 1, %s19
      %s29 = scalar_select %p26, %s28, %s19
      %p30 = scmp.ge.s32.totalorder %s29, 2
      %s31 = scalar_select %p30, 0, %s29
      %s32 = sadd.s32 %s19, %s20
      %s33 = sadd.s32 %s31, %s27
      %s34 = ssub.s32 %s32, %s33
      %p35 = scmp.eq.s32.totalorder %s34, 0
      %s37 = sadd.s32 %s36, 1
      %s38 = scalar_select %p35, %s36, %s37
      %p41 = pneg %p35
      %p42 = scmp.eq.s32.totalorder %s12, 1
      %p43 = por %p41, %p42
      %p44 = scmp.ne.s32.totalorder %s36, %s39
      %p45 = scmp.eq.s32.totalorder %s12, 0
      %p46 = por %p44, %p45
      %p47 = scmp.ne.s32.totalorder %s36, %s39
      %p48 = scmp.eq.s32.totalorder %s17, 1
      %p49 = por %p47, %p48
      %p50 = scmp.ne.s32.totalorder %s39, %s40
      %p51 = scmp.eq.s32.totalorder %s17, 0
      %p52 = por %p50, %p51
      %p53 = scmp.ne.s32.totalorder %s39, %s40
      %p54 = scmp.eq.s32.totalorder %s18, 1
      %p55 = por %p53, %p54
      %p57 = scmp.ne.s32.totalorder %s40, %s56
      %p58 = scmp.eq.s32.totalorder %s18, 0
      %p59 = por %p57, %p58
      %s60 = sadd.s32 %s19, %s20
      %s61 = sadd.s32 %s31, %s27
      %s62 = ssub.s32 %s60, %s61
      %p63 = scmp.eq.s32.totalorder %s62, 0
      %s65 = sadd.s32 %s64, 1
      %s66 = scalar_select %p63, %s64, %s65
      %p69 = pneg %p63
      %p70 = scmp.eq.s32.totalorder %s12, 1
      %p71 = por %p69, %p70
      %p72 = scmp.ne.s32.totalorder %s64, %s67
      %p73 = scmp.eq.s32.totalorder %s12, 0
      %p74 = por %p72, %p73
      %p75 = scmp.ne.s32.totalorder %s64, %s67
      %p76 = scmp.eq.s32.totalorder %s17, 1
      %p77 = por %p75, %p76
      %p78 = scmp.ne.s32.totalorder %s67, %s68
      %p79 = scmp.eq.s32.totalorder %s17, 0
      %p80 = por %p78, %p79
      %p81 = scmp.ne.s32.totalorder %s67, %s68
      %p82 = scmp.eq.s32.totalorder %s18, 1
      %p83 = por %p81, %p82
      %p85 = scmp.ne.s32.totalorder %s68, %s84
      %p86 = scmp.eq.s32.totalorder %s18, 0
      %p87 = por %p85, %p86
      %s88 = sadd.s32 %s19, %s20
      %s89 = sadd.s32 %s31, %s27
      %s90 = ssub.s32 %s88, %s89
      %p91 = scmp.eq.s32.totalorder %s90, 0
      %s93 = sadd.s32 %s92, 1
      %s94 = scalar_select %p91, %s92, %s93
      %p97 = pneg %p91
      %p98 = scmp.eq.s32.totalorder %s12, 1
      %p99 = por %p97, %p98
      %p100 = scmp.ne.s32.totalorder %s92, %s95
      %p101 = scmp.eq.s32.totalorder %s12, 0
      %p102 = por %p100, %p101
      %p103 = scmp.ne.s32.totalorder %s92, %s95
      %p104 = scmp.eq.s32.totalorder %s17, 1
      %p105 = por %p103, %p104
      %p106 = scmp.ne.s32.totalorder %s95, %s96
      %p107 = scmp.eq.s32.totalorder %s17, 0
      %p108 = por %p106, %p107
      %p109 = scmp.ne.s32.totalorder %s95, %s96
      %p110 = scmp.eq.s32.totalorder %s18, 1
      %p111 = por %p109, %p110
      %p113 = scmp.ne.s32.totalorder %s96, %s112
      %p114 = scmp.eq.s32.totalorder %s18, 0
      %p115 = por %p113, %p114
      %s116 = ssub.s32 %s19, %s31
      %p117 = scmp.eq.s32.totalorder %s116, 0
      %s119 = sadd.s32 %s118, 1
      %s120 = scalar_select %p117, %s118, %s119
      %p123 = pneg %p117
      %p124 = scmp.eq.s32.totalorder %s12, 1
      %p125 = por %p123, %p124
      %p126 = scmp.ne.s32.totalorder %s118, %s121
      %p127 = scmp.eq.s32.totalorder %s12, 0
      %p128 = por %p126, %p127
      %p129 = scmp.ne.s32.totalorder %s118, %s121
      %p130 = scmp.eq.s32.totalorder %s17, 1
      %p131 = por %p129, %p130
      %p132 = scmp.ne.s32.totalorder %s121, %s122
      %p133 = scmp.eq.s32.totalorder %s17, 0
      %p134 = por %p132, %p133
      %p135 = scmp.ne.s32.totalorder %s121, %s122
      %p136 = scmp.eq.s32.totalorder %s18, 1
      %p137 = por %p135, %p136
      %p139 = scmp.ne.s32.totalorder %s122, %s138
      %p140 = scmp.eq.s32.totalorder %s18, 0
      %p141 = por %p139, %p140
      %p142 = scmp.le.s32.totalorder 1, %s12
      %p143 = scmp.lt.s32.totalorder %s12, 3
      %p144 = pnand %p142, %p143
      %p145 = pneg %p144
      // Predicated region
      $region9: #{tpu_custom_call.1} parent=5 // pred_check
        _
      $region10: #{tpu_custom_call.1} parent=5 // pred_check_branch
        %147 = sbr.rel (%p144) target = $region12
      $region11: #{tpu_custom_call.1} parent=5 // pred_region
        %s148 = ssub.s32 %s12, 1
      $region12: #{tpu_custom_call.1} parent=5 // pred_fallthru
        _
      %p149 = scmp.lt.s32.totalorder %s12, 2
      // Predicated region
      $region13: #{tpu_custom_call.1} parent=5 // pred_check
        %p150 = pneg %p149
      $region14: #{tpu_custom_call.1} parent=5 // pred_check_branch
        %152 = sbr.rel (%p150) target = $region16
      $region15: #{tpu_custom_call.1} parent=5 // pred_region
        // Predicated region
        $region17: #{tpu_custom_call.1} parent=15 // pred_check
          %p153 = pneg %p46
        $region18: #{tpu_custom_call.1} parent=15 // pred_check_branch
          %155 = sbr.rel (%p153) target = $region20
        $region19: #{tpu_custom_call.1} parent=15 // pred_region
          %s156 = sadd.s32 %s19, %s20
          %p157 = scmp.lt.s32.totalorder %s156, 1
          %s158 = scalar_select %p157, %s156, 1
          %s159 = smul.addr %s158, 8
          %s160 = scalar_lea.vmem %s0, %s159
          %s161 = sadd.s32 %s19, %s20
        $region20: #{tpu_custom_call.1} parent=15 // pred_fallthru
          _
        // Predicated region
        $region21: #{tpu_custom_call.1} parent=15 // pred_check
          %p162 = pneg %p74
        $region22: #{tpu_custom_call.1} parent=15 // pred_check_branch
          %164 = sbr.rel (%p162) target = $region24
        $region23: #{tpu_custom_call.1} parent=15 // pred_region
          %s165 = sadd.s32 %s19, %s20
          %p166 = scmp.lt.s32.totalorder %s165, 1
          %s167 = scalar_select %p166, %s165, 1
          %s168 = smul.addr %s167, 8
          %s169 = scalar_lea.vmem %s1, %s168
          %s170 = sadd.s32 %s19, %s20
        $region24: #{tpu_custom_call.1} parent=15 // pred_fallthru
          _
        // Predicated region
        $region25: #{tpu_custom_call.1} parent=15 // pred_check
          %p171 = pneg %p102
        $region26: #{tpu_custom_call.1} parent=15 // pred_check_branch
          %173 = sbr.rel (%p171) target = $region28
        $region27: #{tpu_custom_call.1} parent=15 // pred_region
          %s174 = sadd.s32 %s19, %s20
          %s175 = smul.u32 5, %s174
          %p176 = scmp.lt.s32.totalorder %s175, 9
          %s177 = scalar_select %p176, %s175, 9
          %s178 = smul.addr %s177, 8
          %s179 = scalar_lea.vmem %s2, %s178
          %s180 = sadd.s32 %s19, %s20
          %s181 = smul.u32 5, %s180
        $region28: #{tpu_custom_call.1} parent=15 // pred_fallthru
          _
      $region16: #{tpu_custom_call.1} parent=5 // pred_fallthru
        _
      %p182 = scmp.le.s32.totalorder 1, %s12
      %p183 = scmp.lt.s32.totalorder %s12, 3
      %p184 = pnand %p182, %p183
      %p185 = pneg %p184
      // Predicated region
      $region29: #{tpu_custom_call.1} parent=5 // pred_check
        _
      $region30: #{tpu_custom_call.1} parent=5 // pred_check_branch
        %187 = sbr.rel (%p184) target = $region32
      $region31: #{tpu_custom_call.1} parent=5 // pred_region
        %s188 = ssub.s32 %s12, 1
        %s189 = sadd.s32 %s21, %s22
        %p190 = scmp.lt.s32.totalorder %s189, 1
        %s191 = scalar_select %p190, %s189, 1
        %s192 = smul.addr %s191, 8
        %s193 = scalar_lea.vmem %s0, %s192
        %p194 = pneg %p52
        %p195 = pneg %p49
        %s196 = sadd.s32 %s21, %s22
        %p197 = scmp.lt.s32.totalorder %s196, 1
        %s198 = scalar_select %p197, %s196, 1
        %s199 = smul.addr %s198, 8
        %s200 = scalar_lea.vmem %s1, %s199
        %p201 = pneg %p80
        %p202 = pneg %p77
        %s203 = sadd.s32 %s21, %s22
        %s204 = smul.u32 5, %s203
        %p205 = scmp.lt.s32.totalorder %s204, 9
        %s206 = scalar_select %p205, %s204, 9
        %s207 = smul.addr %s206, 8
        %s208 = scalar_lea.vmem %s2, %s207
        %p209 = pneg %p108
        %p210 = pneg %p105
        %p211 = pneg %p134
        %p212 = pneg %p131
        %s213 = sand.u32 %s121, 1
        %s214 = scalar_lea.sflag [#allocation3], %s213
        %s215 = sand.u32 %s121, 1
        %s216 = smul.addr %s215, 8
        %s217 = scalar_lea.vmem [#allocation2], %s216
        %s218 = sadd.s32 %s21, %s22
        %p219 = scmp.lt.s32.totalorder %s218, 1
        %s220 = scalar_select %p219, %s218, 1
        %s221 = smul.addr %s220, 8
        %s222 = scalar_lea.vmem %s0, %s221
        %s223 = sadd.s32 %s21, %s22
        %s224 = sadd.s32 %s21, %s22
        %p225 = scmp.lt.s32.totalorder %s224, 1
        %s226 = scalar_select %p225, %s224, 1
        %s227 = smul.addr %s226, 8
        %s228 = scalar_lea.vmem %s1, %s227
        %s229 = sadd.s32 %s21, %s22
        %s230 = sadd.s32 %s21, %s22
        %s231 = smul.u32 5, %s230
        %p232 = scmp.lt.s32.totalorder %s231, 9
        %s233 = scalar_select %p232, %s231, 9
        %s234 = smul.addr %s233, 8
        %s235 = scalar_lea.vmem %s2, %s234
        %s236 = sadd.s32 %s21, %s22
        %s237 = smul.u32 5, %s236
        %s238 = sadd.s32 %s21, %s22
        %p239 = scmp.eq.s32.totalorder %s22, 0
        // Predicated region
        $region33: #{tpu_custom_call.1} parent=31 // pred_check
          %p240 = pneg %p239
        $region34: #{tpu_custom_call.1} parent=31 // pred_check_branch
          %242 = sbr.rel (%p240) target = $region36
        $region35: #{tpu_custom_call.1} parent=31 // pred_region
          %243 = vst [vmem:[%s217] sm:$0xff] 0.0
        $region36: #{tpu_custom_call.1} parent=31 // pred_fallthru
          _
        %v244 = vld [vmem:[%s222] sm:$0xff]
        %v245 = vld [vmem:[%s228] sm:$0xff]
        %v246 = vld [vmem:[%s235] sm:$0xff]
        %v247 = vld [vmem:[%s235 + $0x8] sm:$0xff]
        %v248 = vld [vmem:[%s235 + $0x10] sm:$0xff]
        %v249 = vld [vmem:[%s235 + $0x18] sm:$0xff]
        %v250 = vld [vmem:[%s235 + $0x20] sm:$0xff]
        %v251 = vmul.f32 %v244, %v245
        %vm252 = vcmask 269312
        %v253 = vsel %vm252, %v251, 0.0
        %254 = vadd.xlane.f32.xlu0 %v253
        %v255 = vpop.xlane.xlu0 %254
        %v256 = vsub.f32 0.0, %v255
        %v258 = vsel %vm252, %v244, 0
        %v261 = vsel %vm252, %v246, 0
        %v264 = vsel %vm252, %v247, 0
        %v267 = vsel %vm252, %v248, 0
        %v270 = vsel %vm252, %v249, 0
        %v273 = vsel %vm252, %v250, 0
        %275 = vmatprep.subr.mxu0 0.0
        %276 = vmatpush1.xpose.msra.mxu0 0.0
        %277 = vmatprep.subr.mxu0 0.0
        %278 = vmatpush1.xpose.msra.mxu0 0.0
        %279 = vmatprep.subr.mxu0 0.0
        %280 = vmatpush1.xpose.msra.mxu0 0.0
        %281 = vmatprep.subr.mxu0 0.0
        %282 = vmatpush1.xpose.msra.mxu0 0.0
        %283 = vmatprep.subr.mxu0 0.0
        %284 = vmatpush1.xpose.msra.mxu0 0.0
        %285 = vmatprep.subr.mxu0 0.0
        %286 = vmatpush1.xpose.msra.mxu0 0.0
        %287 = vmatprep.subr.mxu0 0.0
        %288 = vmatpush1.xpose.msra.mxu0 0.0
        %289 = vmatprep.subr.mxu0 0.0
        %290 = vmatpush1.xpose.msra.mxu0 0.0
        %291 = vmatprep.subr.mxu0 0.0
        %292 = vmatpush1.xpose.msra.mxu0 0.0
        %293 = vmatprep.subr.mxu0 0.0
        %294 = vmatpush1.xpose.msra.mxu0 0.0
        %295 = vmatprep.subr.mxu0 0.0
        %296 = vmatpush1.xpose.msra.mxu0 0.0
        %297 = vmatprep.subr.mxu0 0.0
        %298 = vmatpush1.xpose.msra.mxu0 %v273
        %299 = vmatprep.subr.mxu0 0.0
        %300 = vmatpush1.xpose.msra.mxu0 %v270
        %301 = vmatprep.subr.mxu0 0.0
        %302 = vmatpush1.xpose.msra.mxu0 %v267
        %303 = vmatprep.subr.mxu0 0.0
        %304 = vmatpush1.xpose.msra.mxu0 %v264
        %305 = vmatprep.subr.mxu0 0.0
        %306 = vmatpush1.xpose.msra.mxu0 %v261
        %307 = vmatprep.subr.mxu0 0.0
        %308 = vmatpush2.xpose.msra.mxu0 0.0
        %309 = vmatprep.subr.mxu0 0.0
        %310 = vmatpush2.xpose.msra.mxu0 0.0
        %311 = vmatprep.subr.mxu0 0.0
        %312 = vmatpush2.xpose.msra.mxu0 0.0
        %313 = vmatprep.subr.mxu0 0.0
        %314 = vmatpush2.xpose.msra.mxu0 0.0
        %315 = vmatprep.subr.mxu0 0.0
        %316 = vmatpush2.xpose.msra.mxu0 0.0
        %317 = vmatprep.subr.mxu0 0.0
        %318 = vmatpush2.xpose.msra.mxu0 0.0
        %319 = vmatprep.subr.mxu0 0.0
        %320 = vmatpush2.xpose.msra.mxu0 0.0
        %321 = vmatprep.subr.mxu0 0.0
        %322 = vmatpush2.xpose.msra.mxu0 0.0
        %323 = vmatprep.subr.mxu0 0.0
        %324 = vmatpush2.xpose.msra.mxu0 0.0
        %325 = vmatprep.subr.mxu0 0.0
        %326 = vmatpush2.xpose.msra.mxu0 0.0
        %327 = vmatprep.subr.mxu0 0.0
        %328 = vmatpush2.xpose.msra.mxu0 0.0
        %329 = vmatprep.subr.mxu0 0.0
        %330 = vmatpush2.xpose.msra.mxu0 0.0
        %331 = vmatprep.subr.mxu0 0.0
        %332 = vmatpush2.xpose.msra.mxu0 0.0
        %333 = vmatprep.subr.mxu0 0.0
        %334 = vmatpush2.xpose.msra.mxu0 0.0
        %335 = vmatprep.subr.mxu0 0.0
        %336 = vmatpush2.xpose.msra.mxu0 0.0
        %337 = vmatprep.subr.mxu0 0.0
        %338 = vmatpush2.xpose.msra.mxu0 0.0
        %339 = vmatprep.mubr.f32.mxu0 0.0
        %340 = vmatmul.mubr.f32.gmra.mxu0 %v258
        %v341 = vpop.f32.mrf.mxu0
        %v342 = vadd.f32 0.0, %v341
        %v343 = vpop.f32.mrf.mxu0
        %344 = vdwg.mxu0
        %v345 = vsub.f32 0.0, %v342
        %v346 = vlaneseq
        %v347 = vshrl.u32 %v346, 7
        %v348 = vlaneseq
        %v349 = vand.u32 %v348, 127
        %s350 = smul.u32 %s238, 8
        %v351 = vstv %s350
        %v352 = vadd.s32 %v351, %v347
        %v353 = vmul.u32 %v347, 5
        %vm354 = vcmp.ge.s32.totalorder %v349, %v353
        %v355 = vadd.s32 %v353, 5
        %vm356 = vcmp.lt.s32.totalorder %v349, %v355
        %vm357 = vmand %vm354, %vm356
        %vm358 = vcmp.lt.s32.totalorder %v352, 7
        %vm359 = vmand %vm357, %vm358
        %v360 = vsel %vm359, %v345, -1e+30
        %vm361 = vcmask 326656
        %v362 = vsel %vm361, %v360, -inf
        %363 = vmax.xlane.f32.xlu0 %v362
        %v364 = vpop.xlane.xlu0 %363
        %v365 = vmax.f32 %v364, -60.0
        %v366 = vsub.f32 0.0, %v365
        %v367 = vmul.f32 %v366, 1.442695
        %v368 = vpow.pop %v367
        %v369 = vmul.f32 %v368, 1e-06
        %v370 = vsub.f32 %v360, %v365
        %v371 = vmul.f32 %v370, 1.442695
        %v372 = vpow.pop %v371
        %v373 = vsel %vm361, %v372, 0.0
        %374 = vadd.xlane.f32.xlu0 %v373
        %v375 = vpop.xlane.xlu0 %374
        %v376 = vadd.f32 %v369, %v375
        %v377 = vlog2.pop %v376
        %v378 = vmul.f32 %v377, 0.6931472
        %v379 = vadd.f32 %v365, %v378
        %v380 = vsub.f32 %v379, %v256
        %v381 = vsel %vm358, %v380, 0.0
        %v382 = vld [vmem:[%s217] sm:$0xff]
        %vm383 = vcmask 7168
        %v384 = vsel %vm383, %v381, 0.0
        %385 = vadd.xlane.f32.xlu0 %v384
        %v386 = vpop.xlane.xlu0 %385
        %v387 = vrot.slane %v386, 4
        %v388 = vadd.f32 %v386, %v387
        %v389 = vrot.slane %v388, 2
        %v390 = vadd.f32 %v388, %v389
        %v391 = vrot.slane %v390, 1
        %v392 = vadd.f32 %v390, %v391
        %s393 = vtos %v392
        %s394 = smul.f32 %s393, 0.125
        %v395 = vstv %s394
        %v396 = vadd.f32 %v382, %v395
        %397 = vst [vmem:[%s217] sm:$0xff] %v396
        %s398 = sand.u32 %s121, 1
        %s399 = scalar_lea.sflag [#allocation3], %s398
        %s400 = sand.u32 %s121, 1
        %s401 = smul.addr %s400, 8
        %s402 = scalar_lea.vmem [#allocation2], %s401
        // Predicated region
        $region37: #{tpu_custom_call.1} parent=31 // pred_check
          %p403 = pneg %p131
        $region38: #{tpu_custom_call.1} parent=31 // pred_check_branch
          %405 = sbr.rel (%p403) target = $region40
        $region39: #{tpu_custom_call.1} parent=31 // pred_region
          %s407 = ssub.s32 128, 128
          %408 = vsyncadd %s399, %s407
          %s409 = smul.addr %s21, 128
          %s410 = scalar_lea.hbm %s3, %s409
          %s412 = sshll.u32 %s402, 4
          %s413 = int_to_ptr.vmem [resolvable:$true] %s412
          %415 = dma.vmem_to_hbm [thread:$0]  %s413, 128, %s410, %s399
        $region40: #{tpu_custom_call.1} parent=31 // pred_fallthru
          _
      $region32: #{tpu_custom_call.1} parent=5 // pred_fallthru
        _
      %p416 = scmp.le.s32.totalorder 2, %s12
      // Predicated region
      $region41: #{tpu_custom_call.1} parent=5 // pred_check
        %p417 = pneg %p416
      $region42: #{tpu_custom_call.1} parent=5 // pred_check_branch
        %419 = sbr.rel (%p417) target = $region44
      $region43: #{tpu_custom_call.1} parent=5 // pred_region
        %s420 = ssub.s32 %s12, 2
        // Predicated region
        $region45: #{tpu_custom_call.1} parent=43 // pred_check
          %p421 = pneg %p137
        $region46: #{tpu_custom_call.1} parent=43 // pred_check_branch
          %423 = sbr.rel (%p421) target = $region48
        $region47: #{tpu_custom_call.1} parent=43 // pred_region
          %s424 = sand.u32 %s122, 1
          %s425 = scalar_lea.sflag [#allocation3], %s424
          %s426 = sand.u32 %s122, 1
          %s427 = smul.addr %s426, 8
          %s428 = scalar_lea.vmem [#allocation2], %s427
          %429 = dma.done %s425, 128
        $region48: #{tpu_custom_call.1} parent=43 // pred_fallthru
          _
      $region44: #{tpu_custom_call.1} parent=5 // pred_fallthru
        _
    $region6: #{tpu_custom_call.1} parent=1 // loop_footer
      %s16 = sadd.s32 1, %s12
    $region7: #{tpu_custom_call.1} parent=1 // loop_footer_branch
      %11 = sbr.rel target = $region3
    $region8: #{tpu_custom_call.1} parent=1 // loop_exit
      _
    %430 = vsyncpa [#allocation3], 1
    %s431 = scalar_lea.sflag [#allocation3], 1
    %432 = vsyncpa %s431, 1

</llo_original>
